<compile_context>
chip_gen: v6e
topology: v6e:2x2x1
jax: 0.10.0
libtpu: 0.0.40
codegen_flags: <defaults>
</compile_context>

<pallas_src>
import jax
import jax.numpy as jnp
from jax.experimental import pallas as pl
from jax.experimental.pallas import tpu as pltpu


def _make_kernel(eps: float):
    def kernel(x_ref, w_ref, gamma_ref, beta_ref, mean_ref, var_ref, o_ref):
        # x_ref: (c_in, T)   w_ref: (c_out, c_in)   params: (c_out, 1)
        x = x_ref[...]
        w = w_ref[...]
        # 1x1 conv == channel contraction (tiny depth; MXU shaping irrelevant).
        y = jax.lax.dot_general(
            w, x, (((1,), (0,)), ((), ())),
            preferred_element_type=jnp.float32,
        )  # (c_out, T), f32
        # ReLU
        y = jnp.maximum(y, 0.0)
        # BatchNorm (inference): y * scale + shift, per output channel.
        inv = jax.lax.rsqrt(var_ref[...] + eps)          # EUP rsqrt, (c_out, 1)
        scale = gamma_ref[...] * inv
        shift = beta_ref[...] - mean_ref[...] * scale
        o_ref[...] = (y * scale + shift).astype(o_ref.dtype)
    return kernel


def reduce_number_of_channels(image_batch, conv_weight, gamma, beta,
                              running_mean, running_var, eps: float = 1e-5):
    """Pallas equivalent of ReduceNumberOfChannels.forward (eval-mode BN)."""
    b, c_in, h, w = image_batch.shape
    c_out = conv_weight.shape[0]
    hw = h * w

    # Layout glue (free reshapes only, no transposes).
    x_flat = image_batch.reshape(b, c_in, hw)
    w2 = conv_weight.reshape(c_out, c_in).astype(image_batch.dtype)
    gamma2 = gamma.reshape(c_out, 1).astype(jnp.float32)
    beta2 = beta.reshape(c_out, 1).astype(jnp.float32)
    mean2 = running_mean.reshape(c_out, 1).astype(jnp.float32)
    var2 = running_var.reshape(c_out, 1).astype(jnp.float32)

    # Lane-dense spatial tiling: pad h*w up to a multiple of 128, cap tile size.
    LANE = 128
    hw128 = pl.cdiv(hw, LANE) * LANE
    tile = min(4096, hw128)
    n_tiles = pl.cdiv(hw128, tile)
    hw_pad = n_tiles * tile
    if hw_pad != hw:
        x_flat = jnp.pad(x_flat, ((0, 0), (0, 0), (0, hw_pad - hw)))

    kernel = _make_kernel(eps)

    out = pl.pallas_call(
        kernel,
        out_shape=jax.ShapeDtypeStruct((b, c_out, hw_pad), image_batch.dtype),
        grid_spec=pltpu.PrefetchScalarGridSpec(
            num_scalar_prefetch=0,
            grid=(b, n_tiles),
            in_specs=[
                pl.BlockSpec((pl.Squeezed(), c_in, tile),
                             lambda bi, ti: (bi, 0, ti)),
                pl.BlockSpec((c_out, c_in), lambda bi, ti: (0, 0)),
                pl.BlockSpec((c_out, 1), lambda bi, ti: (0, 0)),
                pl.BlockSpec((c_out, 1), lambda bi, ti: (0, 0)),
                pl.BlockSpec((c_out, 1), lambda bi, ti: (0, 0)),
                pl.BlockSpec((c_out, 1), lambda bi, ti: (0, 0)),
            ],
            out_specs=pl.BlockSpec((pl.Squeezed(), c_out, tile),
                                   lambda bi, ti: (bi, 0, ti)),
        ),
        compiler_params=pltpu.CompilerParams(
            dimension_semantics=("parallel", "parallel")),
    )(x_flat, w2, gamma2, beta2, mean2, var2)

    # Drop lane padding and restore NCHW (free reshape, no transpose).
    return out[:, :, :hw].reshape(b, c_out, h, w)


def _reference(image_batch, conv_weight, gamma, beta, running_mean, running_var,
               eps: float = 1e-5):
    """Pure-JAX re-implementation of the torch forward (eval-mode BN)."""
    c_out, c_in = conv_weight.shape[0], conv_weight.shape[1]
    w2 = conv_weight.reshape(c_out, c_in)
    y = jnp.einsum("oi,bihw->bohw", w2, image_batch)         # 1x1 conv, no bias
    y = jnp.maximum(y, 0.0)                                   # ReLU
    inv = jax.lax.rsqrt(running_var + eps)
    scale = (gamma * inv)[None, :, None, None]
    shift = (beta - running_mean * gamma * inv)[None, :, None, None]
    return y * scale + shift


if __name__ == "__main__":
    key = jax.random.PRNGKey(0)
    k1, k2, k3, k4, k5, k6 = jax.random.split(key, 6)
    b, c_in, c_out, h, w = 2, 6, 3, 16, 16

    image_batch = jax.random.normal(k1, (b, c_in, h, w), dtype=jnp.float32)
    conv_weight = jax.random.normal(k2, (c_out, c_in, 1, 1), dtype=jnp.float32) * 0.5
    gamma = 1.0 + 0.1 * jax.random.normal(k3, (c_out,), dtype=jnp.float32)
    beta = 0.1 * jax.random.normal(k4, (c_out,), dtype=jnp.float32)
    running_mean = 0.1 * jax.random.normal(k5, (c_out,), dtype=jnp.float32)
    running_var = jax.random.uniform(k6, (c_out,), dtype=jnp.float32,
                                     minval=0.5, maxval=1.5)

    out = reduce_number_of_channels(image_batch, conv_weight, gamma, beta,
                                    running_mean, running_var)
    out = jax.block_until_ready(out)

    ref = _reference(image_batch, conv_weight, gamma, beta,
                     running_mean, running_var)
    assert out.shape == (b, c_out, h, w), out.shape
    assert jnp.allclose(out, ref, atol=1e-4, rtol=1e-4), float(
        jnp.max(jnp.abs(out - ref)))
    print("KERNEL_OK")
</pallas_src>

<mosaic_0001>
module attributes {stable_mosaic.version = 11 : i64} {
  func.func @kernel(%arg0: i32, %arg1: i32, %arg2: memref<1x6x256xf32, #tpu.memory_space<vmem>>, %arg3: memref<3x6xf32, #tpu.memory_space<vmem>>, %arg4: memref<3x1xf32, #tpu.memory_space<vmem>>, %arg5: memref<3x1xf32, #tpu.memory_space<vmem>>, %arg6: memref<3x1xf32, #tpu.memory_space<vmem>>, %arg7: memref<3x1xf32, #tpu.memory_space<vmem>>, %arg8: memref<1x3x256xf32, #tpu.memory_space<vmem>>) attributes {dimension_semantics = [#tpu.dimension_semantics<parallel>, #tpu.dimension_semantics<parallel>], iteration_bounds = array<i64: 2, 1>, scalar_prefetch = 0 : i64, scratch_operands = 0 : i64, tpu.core_type = #tpu.core_type<tc>, window_params = [{transform_indices = @transform_0, window_bounds = array<i64: 1, 6, 256>}, {pipeline_mode = #tpu.pipeline_mode<synchronous>, transform_indices = @transform_1, window_bounds = array<i64: 3, 6>}, {pipeline_mode = #tpu.pipeline_mode<synchronous>, transform_indices = @transform_2, window_bounds = array<i64: 3, 1>}, {pipeline_mode = #tpu.pipeline_mode<synchronous>, transform_indices = @transform_3, window_bounds = array<i64: 3, 1>}, {pipeline_mode = #tpu.pipeline_mode<synchronous>, transform_indices = @transform_4, window_bounds = array<i64: 3, 1>}, {pipeline_mode = #tpu.pipeline_mode<synchronous>, transform_indices = @transform_5, window_bounds = array<i64: 3, 1>}, {transform_indices = @transform_6, window_bounds = array<i64: 1, 3, 256>}]} {
    %c0 = arith.constant 0 : index
    %c0_0 = arith.constant 0 : index
    %c0_1 = arith.constant 0 : index
    %0 = vector.load %arg2[%c0, %c0_0, %c0_1] : memref<1x6x256xf32, #tpu.memory_space<vmem>>, vector<1x6x256xf32>
    %1 = vector.shape_cast %0 : vector<1x6x256xf32> to vector<6x256xf32>
    %c0_2 = arith.constant 0 : index
    %c0_3 = arith.constant 0 : index
    %2 = vector.load %arg3[%c0_2, %c0_3] : memref<3x6xf32, #tpu.memory_space<vmem>>, vector<3x6xf32>
    %cst = arith.constant dense<0.000000e+00> : vector<3x256xf32>
    %3 = tpu.matmul %2, %1, %cst {dimension_numbers = #tpu.dot_dimension_numbers<[1], [0], [0], [1], [0, 0, 1, 1], [], []>} : vector<3x6xf32>, vector<6x256xf32>, vector<3x256xf32> -> vector<3x256xf32>
    %cst_4 = arith.constant 0.000000e+00 : f32
    %4 = vector.broadcast %cst_4 : f32 to vector<3x256xf32>
    %5 = arith.maximumf %3, %4 : vector<3x256xf32>
    %c0_5 = arith.constant 0 : index
    %c0_6 = arith.constant 0 : index
    %6 = vector.load %arg7[%c0_5, %c0_6] : memref<3x1xf32, #tpu.memory_space<vmem>>, vector<3x1xf32>
    %cst_7 = arith.constant 9.99999974E-6 : f32
    %7 = vector.broadcast %cst_7 : f32 to vector<3x1xf32>
    %8 = arith.addf %6, %7 : vector<3x1xf32>
    %9 = math.rsqrt %8 : vector<3x1xf32>
    %c0_8 = arith.constant 0 : index
    %c0_9 = arith.constant 0 : index
    %10 = vector.load %arg4[%c0_8, %c0_9] : memref<3x1xf32, #tpu.memory_space<vmem>>, vector<3x1xf32>
    %11 = arith.mulf %10, %9 : vector<3x1xf32>
    %c0_10 = arith.constant 0 : index
    %c0_11 = arith.constant 0 : index
    %12 = vector.load %arg5[%c0_10, %c0_11] : memref<3x1xf32, #tpu.memory_space<vmem>>, vector<3x1xf32>
    %c0_12 = arith.constant 0 : index
    %c0_13 = arith.constant 0 : index
    %13 = vector.load %arg6[%c0_12, %c0_13] : memref<3x1xf32, #tpu.memory_space<vmem>>, vector<3x1xf32>
    %14 = arith.mulf %13, %11 : vector<3x1xf32>
    %15 = arith.subf %12, %14 : vector<3x1xf32>
    %16 = vector.broadcast %11 : vector<3x1xf32> to vector<3x256xf32>
    %17 = arith.mulf %5, %16 : vector<3x256xf32>
    %18 = vector.broadcast %15 : vector<3x1xf32> to vector<3x256xf32>
    %19 = arith.addf %17, %18 : vector<3x256xf32>
    %c0_14 = arith.constant 0 : index
    %c0_15 = arith.constant 0 : index
    %c0_16 = arith.constant 0 : index
    %20 = vector.load %arg8[%c0_14, %c0_15, %c0_16] : memref<1x3x256xf32, #tpu.memory_space<vmem>>, vector<1x3x256xf32>
    %21 = vector.shape_cast %20 : vector<1x3x256xf32> to vector<3x256xf32>
    %22 = vector.shape_cast %19 : vector<3x256xf32> to vector<1x3x256xf32>
    tpu.vector_store %arg8[%c0_14, %c0_15, %c0_16], %22 {strides = array<i32>} : memref<1x3x256xf32, #tpu.memory_space<vmem>>, vector<1x3x256xf32>,
    return
  }
  func.func @transform_0(%arg0: i32, %arg1: i32) -> (i32, i32, i32) {
    %c0_i32 = arith.constant 0 : i32
    %c0_i32_0 = arith.constant 0 : i32
    return %arg0, %c0_i32, %arg1 : i32, i32, i32
  }
  func.func @transform_1(%arg0: i32, %arg1: i32) -> (i32, i32) {
    %c0_i32 = arith.constant 0 : i32
    %c0_i32_0 = arith.constant 0 : i32
    %c0_i32_1 = arith.constant 0 : i32
    return %c0_i32, %c0_i32_0 : i32, i32
  }
  func.func @transform_2(%arg0: i32, %arg1: i32) -> (i32, i32) {
    %c0_i32 = arith.constant 0 : i32
    %c0_i32_0 = arith.constant 0 : i32
    %c0_i32_1 = arith.constant 0 : i32
    return %c0_i32, %c0_i32_0 : i32, i32
  }
  func.func @transform_3(%arg0: i32, %arg1: i32) -> (i32, i32) {
    %c0_i32 = arith.constant 0 : i32
    %c0_i32_0 = arith.constant 0 : i32
    %c0_i32_1 = arith.constant 0 : i32
    return %c0_i32, %c0_i32_0 : i32, i32
  }
  func.func @transform_4(%arg0: i32, %arg1: i32) -> (i32, i32) {
    %c0_i32 = arith.constant 0 : i32
    %c0_i32_0 = arith.constant 0 : i32
    %c0_i32_1 = arith.constant 0 : i32
    return %c0_i32, %c0_i32_0 : i32, i32
  }
  func.func @transform_5(%arg0: i32, %arg1: i32) -> (i32, i32) {
    %c0_i32 = arith.constant 0 : i32
    %c0_i32_0 = arith.constant 0 : i32
    %c0_i32_1 = arith.constant 0 : i32
    return %c0_i32, %c0_i32_0 : i32, i32
  }
  func.func @transform_6(%arg0: i32, %arg1: i32) -> (i32, i32, i32) {
    %c0_i32 = arith.constant 0 : i32
    %c0_i32_0 = arith.constant 0 : i32
    return %arg0, %c0_i32, %arg1 : i32, i32, i32
  }
}

</mosaic_0001>

<llo_original>
// kernel: tpu_custom_call.1
$region0: #{tpu_custom_call.1}
  #allocation0 [shape = 'u32[]', space=smem, size = 0x4, offset = 0x4, fixed_abs, tag = 'smem constant byte address 0x4 - core index']
  #allocation1 [shape = 'u32[144,128]{1,0:T(1,128)}', space=vmem, size = 0x12000, scoped, tag = 'internal scratch']
  %s0 = inlined_call_operand.vmem [shape: f32[2,6,256], index: 0, kind: input, shape index: {}]
  %s1 = inlined_call_operand.vmem [shape: f32[3,6], index: 1, kind: input, shape index: {}]
  %s2 = inlined_call_operand.vmem [shape: f32[3,1], index: 2, kind: input, shape index: {}]
  %s3 = inlined_call_operand.vmem [shape: f32[3,1], index: 3, kind: input, shape index: {}]
  %s4 = inlined_call_operand.vmem [shape: f32[3,1], index: 4, kind: input, shape index: {}]
  %s5 = inlined_call_operand.vmem [shape: f32[3,1], index: 5, kind: input, shape index: {}]
  %s6 = inlined_call_operand.vmem [shape: f32[2,3,256], index: 6, kind: output, shape index: {}]
  %s7 = sld [smem:[#allocation0]]
  $region57: #{tpu_custom_call.1} parent=0
    _
  %s9 = ssub.s32 1, %s7
  %s10 = scalar_select 0, %s9, %s7
  loop: start=0, step=1, limit=4
  $region2: #{tpu_custom_call.1} parent=0 // loop_pre_header
    _
  $region3: #{tpu_custom_call.1} parent=0 // loop_header
    %s12 = sphi 0, %s16
    %p13 = scmp.ge.s32.totalorder %s12, 4
    %s19 = sphi 0, %s31
    %s20 = sphi 0, %s27
    %s21 = sphi 0, %s19
    %s22 = sphi 0, %s20
    %s23 = sphi 0, %s21
    %s24 = sphi 0, %s22
    %s36 = sphi 0, %s38
    %s39 = sphi 0, %s36
    %s40 = sphi 0, %s39
    %s56 = sphi 0, %s40
    %s60 = sphi 0, %s60
    %s62 = sphi 0, %s60
    %s63 = sphi 0, %s62
    %s77 = sphi 0, %s63
    %s81 = sphi 0, %s81
    %s83 = sphi 0, %s81
    %s84 = sphi 0, %s83
    %s98 = sphi 0, %s84
    %s102 = sphi 0, %s102
    %s104 = sphi 0, %s102
    %s105 = sphi 0, %s104
    %s119 = sphi 0, %s105
    %s123 = sphi 0, %s123
    %s125 = sphi 0, %s123
    %s126 = sphi 0, %s125
    %s140 = sphi 0, %s126
    %s144 = sphi 0, %s144
    %s146 = sphi 0, %s144
    %s147 = sphi 0, %s146
    %s161 = sphi 0, %s147
    %s169 = sphi 0, %s171
    %s172 = sphi 0, %s169
    %s173 = sphi 0, %s172
    %s189 = sphi 0, %s173
  $region4: #{tpu_custom_call.1} parent=0 // loop_header_branch
    %15 = sbr.rel (%p13) target = $region8
  $region5: #{tpu_custom_call.1} parent=0 // loop_body
    %s17 = ssub.s32 %s12, 1
    %s18 = ssub.s32 %s12, 2
    %s25 = sadd.s32 1, %s20
    %p26 = scmp.ge.s32.totalorder %s25, 1
    %s27 = scalar_select %p26, 0, %s25
    %s28 = sadd.s32 1, %s19
    %s29 = scalar_select %p26, %s28, %s19
    %p30 = scmp.ge.s32.totalorder %s29, 2
    %s31 = scalar_select %p30, 0, %s29
    %s32 = ssub.s32 %s19, %s31
    %s33 = ssub.s32 %s20, %s27
    %s34 = sor.u32 %s32, %s33
    %p35 = scmp.eq.s32.totalorder %s34, 0
    %s37 = sadd.s32 %s36, 1
    %s38 = scalar_select %p35, %s36, %s37
    %p41 = pneg %p35
    %p42 = scmp.eq.s32.totalorder %s12, 1
    %p43 = por %p41, %p42
    %p44 = scmp.ne.s32.totalorder %s36, %s39
    %p45 = scmp.eq.s32.totalorder %s12, 0
    %p46 = por %p44, %p45
    %p47 = scmp.ne.s32.totalorder %s36, %s39
    %p48 = scmp.eq.s32.totalorder %s17, 1
    %p49 = por %p47, %p48
    %p50 = scmp.ne.s32.totalorder %s39, %s40
    %p51 = scmp.eq.s32.totalorder %s17, 0
    %p52 = por %p50, %p51
    %p53 = scmp.ne.s32.totalorder %s39, %s40
    %p54 = scmp.eq.s32.totalorder %s18, 1
    %p55 = por %p53, %p54
    %p57 = scmp.ne.s32.totalorder %s40, %s56
    %p58 = scmp.eq.s32.totalorder %s18, 0
    %p59 = por %p57, %p58
    %s61 = sadd.s32 %s60, 1
    %p64 = scmp.eq.s32.totalorder %s12, 1
    %p65 = scmp.ne.s32.totalorder %s60, %s62
    %p66 = scmp.eq.s32.totalorder %s12, 0
    %p67 = por %p65, %p66
    %p68 = scmp.ne.s32.totalorder %s60, %s62
    %p69 = scmp.eq.s32.totalorder %s17, 1
    %p70 = por %p68, %p69
    %p71 = scmp.ne.s32.totalorder %s62, %s63
    %p72 = scmp.eq.s32.totalorder %s17, 0
    %p73 = por %p71, %p72
    %p74 = scmp.ne.s32.totalorder %s62, %s63
    %p75 = scmp.eq.s32.totalorder %s18, 1
    %p76 = por %p74, %p75
    %p78 = scmp.ne.s32.totalorder %s63, %s77
    %p79 = scmp.eq.s32.totalorder %s18, 0
    %p80 = por %p78, %p79
    %s82 = sadd.s32 %s81, 1
    %p85 = scmp.eq.s32.totalorder %s12, 1
    %p86 = scmp.ne.s32.totalorder %s81, %s83
    %p87 = scmp.eq.s32.totalorder %s12, 0
    %p88 = por %p86, %p87
    %p89 = scmp.ne.s32.totalorder %s81, %s83
    %p90 = scmp.eq.s32.totalorder %s17, 1
    %p91 = por %p89, %p90
    %p92 = scmp.ne.s32.totalorder %s83, %s84
    %p93 = scmp.eq.s32.totalorder %s17, 0
    %p94 = por %p92, %p93
    %p95 = scmp.ne.s32.totalorder %s83, %s84
    %p96 = scmp.eq.s32.totalorder %s18, 1
    %p97 = por %p95, %p96
    %p99 = scmp.ne.s32.totalorder %s84, %s98
    %p100 = scmp.eq.s32.totalorder %s18, 0
    %p101 = por %p99, %p100
    %s103 = sadd.s32 %s102, 1
    %p106 = scmp.eq.s32.totalorder %s12, 1
    %p107 = scmp.ne.s32.totalorder %s102, %s104
    %p108 = scmp.eq.s32.totalorder %s12, 0
    %p109 = por %p107, %p108
    %p110 = scmp.ne.s32.totalorder %s102, %s104
    %p111 = scmp.eq.s32.totalorder %s17, 1
    %p112 = por %p110, %p111
    %p113 = scmp.ne.s32.totalorder %s104, %s105
    %p114 = scmp.eq.s32.totalorder %s17, 0
    %p115 = por %p113, %p114
    %p116 = scmp.ne.s32.totalorder %s104, %s105
    %p117 = scmp.eq.s32.totalorder %s18, 1
    %p118 = por %p116, %p117
    %p120 = scmp.ne.s32.totalorder %s105, %s119
    %p121 = scmp.eq.s32.totalorder %s18, 0
    %p122 = por %p120, %p121
    %s124 = sadd.s32 %s123, 1
    %p127 = scmp.eq.s32.totalorder %s12, 1
    %p128 = scmp.ne.s32.totalorder %s123, %s125
    %p129 = scmp.eq.s32.totalorder %s12, 0
    %p130 = por %p128, %p129
    %p131 = scmp.ne.s32.totalorder %s123, %s125
    %p132 = scmp.eq.s32.totalorder %s17, 1
    %p133 = por %p131, %p132
    %p134 = scmp.ne.s32.totalorder %s125, %s126
    %p135 = scmp.eq.s32.totalorder %s17, 0
    %p136 = por %p134, %p135
    %p137 = scmp.ne.s32.totalorder %s125, %s126
    %p138 = scmp.eq.s32.totalorder %s18, 1
    %p139 = por %p137, %p138
    %p141 = scmp.ne.s32.totalorder %s126, %s140
    %p142 = scmp.eq.s32.totalorder %s18, 0
    %p143 = por %p141, %p142
    %s145 = sadd.s32 %s144, 1
    %p148 = scmp.eq.s32.totalorder %s12, 1
    %p149 = scmp.ne.s32.totalorder %s144, %s146
    %p150 = scmp.eq.s32.totalorder %s12, 0
    %p151 = por %p149, %p150
    %p152 = scmp.ne.s32.totalorder %s144, %s146
    %p153 = scmp.eq.s32.totalorder %s17, 1
    %p154 = por %p152, %p153
    %p155 = scmp.ne.s32.totalorder %s146, %s147
    %p156 = scmp.eq.s32.totalorder %s17, 0
    %p157 = por %p155, %p156
    %p158 = scmp.ne.s32.totalorder %s146, %s147
    %p159 = scmp.eq.s32.totalorder %s18, 1
    %p160 = por %p158, %p159
    %p162 = scmp.ne.s32.totalorder %s147, %s161
    %p163 = scmp.eq.s32.totalorder %s18, 0
    %p164 = por %p162, %p163
    %s165 = ssub.s32 %s19, %s31
    %s166 = ssub.s32 %s20, %s27
    %s167 = sor.u32 %s165, %s166
    %p168 = scmp.eq.s32.totalorder %s167, 0
    %s170 = sadd.s32 %s169, 1
    %s171 = scalar_select %p168, %s169, %s170
    %p174 = pneg %p168
    %p175 = scmp.eq.s32.totalorder %s12, 1
    %p176 = por %p174, %p175
    %p177 = scmp.ne.s32.totalorder %s169, %s172
    %p178 = scmp.eq.s32.totalorder %s12, 0
    %p179 = por %p177, %p178
    %p180 = scmp.ne.s32.totalorder %s169, %s172
    %p181 = scmp.eq.s32.totalorder %s17, 1
    %p182 = por %p180, %p181
    %p183 = scmp.ne.s32.totalorder %s172, %s173
    %p184 = scmp.eq.s32.totalorder %s17, 0
    %p185 = por %p183, %p184
    %p186 = scmp.ne.s32.totalorder %s172, %s173
    %p187 = scmp.eq.s32.totalorder %s18, 1
    %p188 = por %p186, %p187
    %p190 = scmp.ne.s32.totalorder %s173, %s189
    %p191 = scmp.eq.s32.totalorder %s18, 0
    %p192 = por %p190, %p191
    %p193 = scmp.le.s32.totalorder 1, %s12
    %p194 = scmp.lt.s32.totalorder %s12, 3
    %p195 = pnand %p193, %p194
    %p196 = pneg %p195
    // Predicated region
    $region9: #{tpu_custom_call.1} parent=5 // pred_check
      _
    $region10: #{tpu_custom_call.1} parent=5 // pred_check_branch
      %198 = sbr.rel (%p195) target = $region12
    $region11: #{tpu_custom_call.1} parent=5 // pred_region
      %s199 = ssub.s32 %s12, 1
      // Predicated region
      $region13: #{tpu_custom_call.1} parent=11 // pred_check
        %p200 = pneg %p73
      $region14: #{tpu_custom_call.1} parent=11 // pred_check_branch
        %202 = sbr.rel (%p200) target = $region16
      $region15: #{tpu_custom_call.1} parent=11 // pred_region
        _
      $region16: #{tpu_custom_call.1} parent=11 // pred_fallthru
        _
      // Predicated region
      $region17: #{tpu_custom_call.1} parent=11 // pred_check
        %p203 = pneg %p94
      $region18: #{tpu_custom_call.1} parent=11 // pred_check_branch
        %205 = sbr.rel (%p203) target = $region20
      $region19: #{tpu_custom_call.1} parent=11 // pred_region
        _
      $region20: #{tpu_custom_call.1} parent=11 // pred_fallthru
        _
      // Predicated region
      $region21: #{tpu_custom_call.1} parent=11 // pred_check
        %p206 = pneg %p115
      $region22: #{tpu_custom_call.1} parent=11 // pred_check_branch
        %208 = sbr.rel (%p206) target = $region24
      $region23: #{tpu_custom_call.1} parent=11 // pred_region
        _
      $region24: #{tpu_custom_call.1} parent=11 // pred_fallthru
        _
      // Predicated region
      $region25: #{tpu_custom_call.1} parent=11 // pred_check
        %p209 = pneg %p136
      $region26: #{tpu_custom_call.1} parent=11 // pred_check_branch
        %211 = sbr.rel (%p209) target = $region28
      $region27: #{tpu_custom_call.1} parent=11 // pred_region
        _
      $region28: #{tpu_custom_call.1} parent=11 // pred_fallthru
        _
      // Predicated region
      $region29: #{tpu_custom_call.1} parent=11 // pred_check
        %p212 = pneg %p157
      $region30: #{tpu_custom_call.1} parent=11 // pred_check_branch
        %214 = sbr.rel (%p212) target = $region32
      $region31: #{tpu_custom_call.1} parent=11 // pred_region
        _
      $region32: #{tpu_custom_call.1} parent=11 // pred_fallthru
        _
    $region12: #{tpu_custom_call.1} parent=5 // pred_fallthru
      _
    %p215 = scmp.lt.s32.totalorder %s12, 2
    // Predicated region
    $region33: #{tpu_custom_call.1} parent=5 // pred_check
      %p216 = pneg %p215
    $region34: #{tpu_custom_call.1} parent=5 // pred_check_branch
      %218 = sbr.rel (%p216) target = $region36
    $region35: #{tpu_custom_call.1} parent=5 // pred_region
      // Predicated region
      $region37: #{tpu_custom_call.1} parent=35 // pred_check
        %p219 = pneg %p46
      $region38: #{tpu_custom_call.1} parent=35 // pred_check_branch
        %221 = sbr.rel (%p219) target = $region40
      $region39: #{tpu_custom_call.1} parent=35 // pred_region
        %s222 = smul.u32 2, %s20
        %p223 = scmp.lt.s32.totalorder %s19, 1
        %s224 = scalar_select %p223, %s19, 1
        %p225 = scmp.lt.s32.totalorder %s222, 1
        %s226 = scalar_select %p225, %s222, 1
        %s227 = smul.addr %s224, 2
        %s228 = sadd.s32 %s226, %s227
        %s229 = smul.addr %s228, 8
        %s230 = scalar_lea.vmem %s0, %s229
        %s231 = smul.u32 2, %s20
      $region40: #{tpu_custom_call.1} parent=35 // pred_fallthru
        _
    $region36: #{tpu_custom_call.1} parent=5 // pred_fallthru
      _
    %p232 = scmp.le.s32.totalorder 1, %s12
    %p233 = scmp.lt.s32.totalorder %s12, 3
    %p234 = pnand %p232, %p233
    %p235 = pneg %p234
    // Predicated region
    $region41: #{tpu_custom_call.1} parent=5 // pred_check
      _
    $region42: #{tpu_custom_call.1} parent=5 // pred_check_branch
      %237 = sbr.rel (%p234) target = $region44
    $region43: #{tpu_custom_call.1} parent=5 // pred_region
      %s238 = ssub.s32 %s12, 1
      %s239 = smul.u32 2, %s22
      %p240 = scmp.lt.s32.totalorder %s21, 1
      %s241 = scalar_select %p240, %s21, 1
      %p242 = scmp.lt.s32.totalorder %s239, 1
      %s243 = scalar_select %p242, %s239, 1
      %s244 = smul.addr %s241, 2
      %s245 = sadd.s32 %s243, %s244
      %s246 = smul.addr %s245, 8
      %s247 = scalar_lea.vmem %s0, %s246
      %p248 = pneg %p52
      %p249 = pneg %p49
      %p250 = pneg %p73
      %p251 = pneg %p70
      %p252 = pneg %p94
      %p253 = pneg %p91
      %p254 = pneg %p115
      %p255 = pneg %p112
      %p256 = pneg %p136
      %p257 = pneg %p133
      %p258 = pneg %p157
      %p259 = pneg %p154
      %p260 = pneg %p185
      %p261 = pneg %p182
      %s262 = smul.u32 2, %s22
      %p263 = scmp.lt.s32.totalorder %s21, 1
      %s264 = scalar_select %p263, %s21, 1
      %p265 = scmp.lt.s32.totalorder %s262, 1
      %s266 = scalar_select %p265, %s262, 1
      %s267 = smul.addr %s264, 2
      %s268 = sadd.s32 %s266, %s267
      %s269 = smul.addr %s268, 4
      %s270 = scalar_lea.vmem %s6, %s269
      %s271 = smul.u32 2, %s22
      %p272 = scmp.lt.s32.totalorder %s21, 1
      %s273 = scalar_select %p272, %s21, 1
      %p274 = scmp.lt.s32.totalorder %s271, 1
      %s275 = scalar_select %p274, %s271, 1
      %s276 = smul.addr %s273, 2
      %s277 = sadd.s32 %s275, %s276
      %s278 = smul.addr %s277, 8
      %s279 = scalar_lea.vmem %s0, %s278
      %s280 = smul.u32 2, %s22
      %s281 = smul.u32 2, %s22
      %p282 = scmp.lt.s32.totalorder %s21, 1
      %s283 = scalar_select %p282, %s21, 1
      %p284 = scmp.lt.s32.totalorder %s281, 1
      %s285 = scalar_select %p284, %s281, 1
      %s286 = smul.addr %s283, 2
      %s287 = sadd.s32 %s285, %s286
      %s288 = smul.addr %s287, 4
      %s289 = scalar_lea.vmem %s6, %s288
      %s290 = smul.u32 2, %s22
      %v291 = vld [vmem:[%s279] sm:$0x3f]
      %v292 = vld [vmem:[%s279 + $0x8] sm:$0x3f]
      %v293 = vld [vmem:[%s1] sm:$0x7]
      %vm294 = vcmask 48128
      %v296 = vsel %vm294, %v293, 0
      %vm298 = vcmask 1045504
      %v300 = vsel %vm298, %v291, 0
      %v303 = vsel %vm298, %v292, 0
      %305 = vmatprep.subr.mxu0 0.0
      %306 = vmatpush1.msra.mxu0 0.0
      %307 = vmatprep.subr.mxu0 0.0
      %308 = vmatpush1.msra.mxu0 0.0
      %309 = vmatprep.subr.mxu0 0.0
      %310 = vmatpush1.msra.mxu0 0.0
      %311 = vmatprep.subr.mxu0 0.0
      %312 = vmatpush1.msra.mxu0 0.0
      %313 = vmatprep.subr.mxu0 0.0
      %314 = vmatpush1.msra.mxu0 0.0
      %315 = vmatprep.subr.mxu0 0.0
      %316 = vmatpush1.msra.mxu0 0.0
      %317 = vmatprep.subr.mxu0 0.0
      %318 = vmatpush1.msra.mxu0 0.0
      %319 = vmatprep.subr.mxu0 0.0
      %320 = vmatpush1.msra.mxu0 0.0
      %321 = vmatprep.subr.mxu0 0.0
      %322 = vmatpush1.msra.mxu0 0.0
      %323 = vmatprep.subr.mxu0 0.0
      %324 = vmatpush1.msra.mxu0 0.0
      %325 = vmatprep.subr.mxu0 0.0
      %326 = vmatpush1.msra.mxu0 0.0
      %327 = vmatprep.subr.mxu0 0.0
      %328 = vmatpush1.msra.mxu0 0.0
      %329 = vmatprep.subr.mxu0 0.0
      %330 = vmatpush1.msra.mxu0 0.0
      %331 = vmatprep.subr.mxu0 0.0
      %332 = vmatpush1.msra.mxu0 0.0
      %333 = vmatprep.subr.mxu0 0.0
      %334 = vmatpush1.msra.mxu0 0.0
      %335 = vmatprep.subr.mxu0 %v303
      %336 = vmatpush1.msra.mxu0 %v300
      %337 = vmatprep.subr.mxu0 0.0
      %338 = vmatpush2.msra.mxu0 0.0
      %339 = vmatprep.subr.mxu0 0.0
      %340 = vmatpush2.msra.mxu0 0.0
      %341 = vmatprep.subr.mxu0 0.0
      %342 = vmatpush2.msra.mxu0 0.0
      %343 = vmatprep.subr.mxu0 0.0
      %344 = vmatpush2.msra.mxu0 0.0
      %345 = vmatprep.subr.mxu0 0.0
      %346 = vmatpush2.msra.mxu0 0.0
      %347 = vmatprep.subr.mxu0 0.0
      %348 = vmatpush2.msra.mxu0 0.0
      %349 = vmatprep.subr.mxu0 0.0
      %350 = vmatpush2.msra.mxu0 0.0
      %351 = vmatprep.subr.mxu0 0.0
      %352 = vmatpush2.msra.mxu0 0.0
      %353 = vmatprep.subr.mxu0 0.0
      %354 = vmatpush2.msra.mxu0 0.0
      %355 = vmatprep.subr.mxu0 0.0
      %356 = vmatpush2.msra.mxu0 0.0
      %357 = vmatprep.subr.mxu0 0.0
      %358 = vmatpush2.msra.mxu0 0.0
      %359 = vmatprep.subr.mxu0 0.0
      %360 = vmatpush2.msra.mxu0 0.0
      %361 = vmatprep.subr.mxu0 0.0
      %362 = vmatpush2.msra.mxu0 0.0
      %363 = vmatprep.subr.mxu0 0.0
      %364 = vmatpush2.msra.mxu0 0.0
      %365 = vmatprep.subr.mxu0 0.0
      %366 = vmatpush2.msra.mxu0 0.0
      %367 = vmatprep.subr.mxu0 0.0
      %368 = vmatpush2.msra.mxu0 0.0
      %369 = vmatprep.mubr.f32.mxu0 0.0
      %370 = vmatmul.mubr.f32.gmra.mxu0 %v296
      %v371 = vpop.f32.mrf.mxu0
      %v372 = vadd.f32 0.0, %v371
      %v373 = vpop.f32.mrf.mxu0
      %v374 = vadd.f32 0.0, %v373
      %375 = vdwg.mxu0
      %v376 = vmax.f32 %v372, 0.0
      %v377 = vmax.f32 %v374, 0.0
      %v378 = vld [vmem:[%s5] sm:$0x7]
      %v379 = vadd.f32 %v378, 1e-05
      %v380 = vrsqrt.pop %v379
      %v381 = vld [vmem:[%s2] sm:$0x7]
      %v382 = vmul.f32 %v381, %v380
      %v383 = vld [vmem:[%s3] sm:$0x7]
      %v384 = vld [vmem:[%s4] sm:$0x7]
      %v385 = vmul.f32 %v384, %v382
      %v386 = vsub.f32 %v383, %v385
      %388 = vset.pattern.permute.xlu0 0
      %389 = vperm.xlu0 %388, %v382
      %v390 = vpop.permute.xlu0 %389
      %v392 = vmul.f32 %v376, %v390
      %v393 = vmul.f32 %v377, %v390
      %395 = vset.pattern.permute.xlu0 0
      %396 = vperm.xlu0 %395, %v386
      %v397 = vpop.permute.xlu0 %396
      %v399 = vadd.f32 %v392, %v397
      %v400 = vadd.f32 %v393, %v397
      %v403 = vcombine.low %v399, %v400
      %405 = vst [vmem:[%s289] sm:$0x77] %v403
      %s406 = smul.u32 2, %s22
      %p407 = scmp.lt.s32.totalorder %s21, 1
      %s408 = scalar_select %p407, %s21, 1
      %p409 = scmp.lt.s32.totalorder %s406, 1
      %s410 = scalar_select %p409, %s406, 1
      %s411 = smul.addr %s408, 2
      %s412 = sadd.s32 %s410, %s411
      %s413 = smul.addr %s412, 4
      %s414 = scalar_lea.vmem %s6, %s413
      // Predicated region
      $region45: #{tpu_custom_call.1} parent=43 // pred_check
        %p415 = pneg %p182
      $region46: #{tpu_custom_call.1} parent=43 // pred_check_branch
        %417 = sbr.rel (%p415) target = $region48
      $region47: #{tpu_custom_call.1} parent=43 // pred_region
        %s418 = smul.u32 2, %s22
      $region48: #{tpu_custom_call.1} parent=43 // pred_fallthru
        _
    $region44: #{tpu_custom_call.1} parent=5 // pred_fallthru
      _
    %p419 = scmp.le.s32.totalorder 2, %s12
    // Predicated region
    $region49: #{tpu_custom_call.1} parent=5 // pred_check
      %p420 = pneg %p419
    $region50: #{tpu_custom_call.1} parent=5 // pred_check_branch
      %422 = sbr.rel (%p420) target = $region52
    $region51: #{tpu_custom_call.1} parent=5 // pred_region
      %s423 = ssub.s32 %s12, 2
      // Predicated region
      $region53: #{tpu_custom_call.1} parent=51 // pred_check
        %p424 = pneg %p188
      $region54: #{tpu_custom_call.1} parent=51 // pred_check_branch
        %426 = sbr.rel (%p424) target = $region56
      $region55: #{tpu_custom_call.1} parent=51 // pred_region
        %s427 = smul.u32 2, %s24
        %p428 = scmp.lt.s32.totalorder %s23, 1
        %s429 = scalar_select %p428, %s23, 1
        %p430 = scmp.lt.s32.totalorder %s427, 1
        %s431 = scalar_select %p430, %s427, 1
        %s432 = smul.addr %s429, 2
        %s433 = sadd.s32 %s431, %s432
        %s434 = smul.addr %s433, 4
        %s435 = scalar_lea.vmem %s6, %s434
      $region56: #{tpu_custom_call.1} parent=51 // pred_fallthru
        _
    $region52: #{tpu_custom_call.1} parent=5 // pred_fallthru
      _
  $region6: #{tpu_custom_call.1} parent=0 // loop_footer
    %s16 = sadd.s32 1, %s12
  $region7: #{tpu_custom_call.1} parent=0 // loop_footer_branch
    %11 = sbr.rel target = $region3
  $region8: #{tpu_custom_call.1} parent=0 // loop_exit
    _

</llo_original>
